<compile_context>
chip_gen: v5e
topology: v5e:2x2
jax: 0.10.0
libtpu: 0.0.40
codegen_flags: <defaults>
</compile_context>

<pallas_src>
import jax
import jax.numpy as jnp
from jax.experimental import pallas as pl
from jax.experimental.pallas import tpu as pltpu


def _round_up(v, m):
    return ((v + m - 1) // m) * m


def adaptive_gcn_kernel(x_ref, adj_w_ref, gcn_w_ref, gcn_b_ref, out_ref):
    x = x_ref[...]            # [N, C_in_p]   f32, zero-padded past C_in
    adj_w = adj_w_ref[...]    # [C_in_p, C_in_p]
    gcn_w = gcn_w_ref[...]    # [C_in_p, C_out_p]
    gcn_b = gcn_b_ref[...]    # [1, C_out_p]

    n = x.shape[0]

    # Diagonal mask: (N,1) sublane iota vs (1,N) lane iota, broadcast compare.
    rows = jax.lax.broadcasted_iota(jnp.int32, (n, 1), 0)
    cols = jax.lax.broadcasted_iota(jnp.int32, (1, n), 1)
    diag = rows == cols                                               # [N, N] bool

    # --- adaptive adjacency: x @ W_adj @ x.T + I --------------------------
    xw = jnp.dot(x, adj_w, preferred_element_type=jnp.float32)        # [N, C_in_p]
    # xw @ x.T without an explicit transpose: contract last dims of both.
    adj = jax.lax.dot_general(
        xw, x,
        dimension_numbers=(((1,), (1,)), ((), ())),
        preferred_element_type=jnp.float32)                           # [N, N]
    adj = jnp.where(diag, adj + 1.0, adj)                             # fused +I

    # --- symmetric normalization (torch: row_sum.pow(-0.5)) ---------------
    # Only the != 0 pattern is consumed below, but the scaling is kept so
    # NaN/Inf/underflow edge cases match the torch code exactly.
    row_sum = jnp.sum(adj, axis=1, keepdims=True)                     # [N, 1]
    d_inv_sqrt = jax.lax.rsqrt(row_sum)                               # NaN/inf like pow(-0.5)

    # --- dense_to_sparse pattern + GCNConv add_remaining_self_loops -------
    edge = (adj * d_inv_sqrt * d_inv_sqrt.T) != 0.0
    a_bin = jnp.where(edge | diag, 1.0, 0.0)                          # [N, N]

    # --- GCNConv: gcn_norm folded into the matmul operands ----------------
    deg = jnp.sum(a_bin, axis=1, keepdims=True)                       # [N, 1], >= 1
    dis = jax.lax.rsqrt(deg)                                          # [N, 1]

    h = jnp.dot(x, gcn_w, preferred_element_type=jnp.float32)         # [N, C_out_p]
    agg = jnp.dot(a_bin, dis * h, preferred_element_type=jnp.float32) # [N, C_out_p]
    out_ref[...] = (dis * agg + gcn_b).astype(out_ref.dtype)


@jax.jit
def adaptive_gcn_layer(x, adj_weight, gcn_weight, gcn_bias):
    n, c_in = x.shape
    c_out = gcn_weight.shape[1]

    # Lane-dense padding: pad both the contraction dim (C_in) and the output
    # channel dim (C_out) to multiples of 128. Zeros change nothing; the MXU
    # pads K < 128 internally anyway, so the matmul time is identical while
    # every vld/vst on the operands becomes unmasked.
    c_in_p = _round_up(c_in, 128)
    c_out_p = _round_up(c_out, 128)

    x_p = jnp.pad(x.astype(jnp.float32), ((0, 0), (0, c_in_p - c_in)))
    adj_w_p = jnp.pad(adj_weight.astype(jnp.float32),
                      ((0, c_in_p - c_in), (0, c_in_p - c_in)))
    gcn_w_p = jnp.pad(gcn_weight.astype(jnp.float32),
                      ((0, c_in_p - c_in), (0, c_out_p - c_out)))
    gcn_b_p = jnp.pad(gcn_bias.astype(jnp.float32).reshape(1, c_out),
                      ((0, 0), (0, c_out_p - c_out)))

    out_p = pl.pallas_call(
        adaptive_gcn_kernel,
        out_shape=jax.ShapeDtypeStruct((n, c_out_p), jnp.float32),
        in_specs=[
            pl.BlockSpec(memory_space=pltpu.MemorySpace.VMEM),
            pl.BlockSpec(memory_space=pltpu.MemorySpace.VMEM),
            pl.BlockSpec(memory_space=pltpu.MemorySpace.VMEM),
            pl.BlockSpec(memory_space=pltpu.MemorySpace.VMEM),
        ],
        out_specs=pl.BlockSpec(memory_space=pltpu.MemorySpace.VMEM),
        compiler_params=pltpu.CompilerParams(
            vmem_limit_bytes=64 * 1024 * 1024),
    )(x_p, adj_w_p, gcn_w_p, gcn_b_p)

    return out_p[:, :c_out]


def reference(x, adj_weight, gcn_weight, gcn_bias):
    n = x.shape[0]
    adj = x @ adj_weight @ x.T + jnp.eye(n)
    d = jnp.sum(adj, axis=1, keepdims=True) ** -0.5
    adj = adj * d * d.T
    a = jnp.where(adj != 0, 1.0, 0.0)
    a = jnp.where(jnp.eye(n) > 0, 1.0, a)
    deg = jnp.sum(a, axis=1, keepdims=True)
    dis = 1.0 / jnp.sqrt(deg)
    a_norm = a * dis * dis.T
    return a_norm @ (x @ gcn_weight) + gcn_bias[None, :]


if __name__ == "__main__":
    # Small but non-trivial graph; in-kernel choices only become measurable
    # at N in the hundreds-to-thousands range (see review), correctness is
    # what is exercised here.
    N, C_IN, C_OUT = 64, 8, 16

    key = jax.random.PRNGKey(0)
    kx, kadj, kgcn = jax.random.split(key, 3)

    # node features
    x = jax.random.normal(kx, (N, C_IN), dtype=jnp.float32)

    # adj_weight: xavier_uniform_ on [C_in, C_in]
    lim_adj = (6.0 / (C_IN + C_IN)) ** 0.5
    adj_weight = jax.random.uniform(kadj, (C_IN, C_IN), jnp.float32,
                                    minval=-lim_adj, maxval=lim_adj)

    # GCNConv weight: glorot on [C_in, C_out]; bias: zeros
    lim_gcn = (6.0 / (C_IN + C_OUT)) ** 0.5
    gcn_weight = jax.random.uniform(kgcn, (C_IN, C_OUT), jnp.float32,
                                    minval=-lim_gcn, maxval=lim_gcn)
    gcn_bias = jnp.zeros((C_OUT,), jnp.float32)

    out = adaptive_gcn_layer(x, adj_weight, gcn_weight, gcn_bias)
    out = jax.block_until_ready(out)

    ref = reference(x, adj_weight, gcn_weight, gcn_bias)
    assert out.shape == (N, C_OUT)
    assert jnp.allclose(out, ref, atol=1e-4, rtol=1e-4), "mismatch vs reference"

    print("KERNEL_OK")
</pallas_src>

<mosaic_0001>
module attributes {stable_mosaic.version = 11 : i64} {
  func.func @adaptive_gcn_kernel(%arg0: memref<64x128xf32, #tpu.memory_space<vmem>>, %arg1: memref<128x128xf32, #tpu.memory_space<vmem>>, %arg2: memref<128x128xf32, #tpu.memory_space<vmem>>, %arg3: memref<1x128xf32, #tpu.memory_space<vmem>>, %arg4: memref<64x128xf32, #tpu.memory_space<vmem>>) attributes {dimension_semantics = [], scalar_prefetch = 0 : i64, scratch_operands = 0 : i64, tpu.core_type = #tpu.core_type<tc>} {
    %c0 = arith.constant 0 : index
    %c0_0 = arith.constant 0 : index
    %0 = vector.load %arg0[%c0, %c0_0] : memref<64x128xf32, #tpu.memory_space<vmem>>, vector<64x128xf32>
    %c0_1 = arith.constant 0 : index
    %c0_2 = arith.constant 0 : index
    %1 = vector.load %arg1[%c0_1, %c0_2] : memref<128x128xf32, #tpu.memory_space<vmem>>, vector<128x128xf32>
    %c0_3 = arith.constant 0 : index
    %c0_4 = arith.constant 0 : index
    %2 = vector.load %arg2[%c0_3, %c0_4] : memref<128x128xf32, #tpu.memory_space<vmem>>, vector<128x128xf32>
    %c0_5 = arith.constant 0 : index
    %c0_6 = arith.constant 0 : index
    %3 = vector.load %arg3[%c0_5, %c0_6] : memref<1x128xf32, #tpu.memory_space<vmem>>, vector<1x128xf32>
    %4 = tpu.iota {dimensions = array<i32: 0>} : vector<64x1xi32>
    %5 = tpu.iota {dimensions = array<i32: 1>} : vector<1x64xi32>
    %6 = vector.broadcast %4 : vector<64x1xi32> to vector<64x64xi32>
    %7 = vector.broadcast %5 : vector<1x64xi32> to vector<64x64xi32>
    %8 = arith.cmpi eq, %6, %7 : vector<64x64xi32>
    %cst = arith.constant dense<0.000000e+00> : vector<64x128xf32>
    %9 = tpu.matmul %0, %1, %cst {dimension_numbers = #tpu.dot_dimension_numbers<[1], [0], [0], [1], [0, 0, 1, 1], [], []>} : vector<64x128xf32>, vector<128x128xf32>, vector<64x128xf32> -> vector<64x128xf32>
    %cst_7 = arith.constant dense<0.000000e+00> : vector<64x64xf32>
    %10 = tpu.matmul %9, %0, %cst_7 {dimension_numbers = #tpu.dot_dimension_numbers<[1], [1], [0], [0], [0, 0, 1, 0], [], []>} : vector<64x128xf32>, vector<64x128xf32>, vector<64x64xf32> -> vector<64x64xf32>
    %cst_8 = arith.constant 1.000000e+00 : f32
    %11 = vector.broadcast %cst_8 : f32 to vector<64x64xf32>
    %12 = arith.addf %10, %11 : vector<64x64xf32>
    %13 = arith.select %8, %12, %10 : vector<64x64xi1>, vector<64x64xf32>
    %cst_9 = arith.constant dense<0.000000e+00> : vector<64xf32>
    %14 = vector.multi_reduction <add>, %13, %cst_9 [1] : vector<64x64xf32> to vector<64xf32>
    %15 = vector.shape_cast %14 : vector<64xf32> to vector<64x1xf32>
    %16 = math.rsqrt %15 : vector<64x1xf32>
    %17 = vector.broadcast %16 : vector<64x1xf32> to vector<64x64xf32>
    %18 = arith.mulf %13, %17 : vector<64x64xf32>
    %19 = tpu.transpose %16, [1, 0] : vector<64x1xf32> -> vector<1x64xf32>
    %20 = vector.broadcast %19 : vector<1x64xf32> to vector<64x64xf32>
    %21 = arith.mulf %18, %20 : vector<64x64xf32>
    %cst_10 = arith.constant 0.000000e+00 : f32
    %22 = vector.broadcast %cst_10 : f32 to vector<64x64xf32>
    %23 = arith.cmpf one, %21, %22 : vector<64x64xf32>
    %24 = arith.ori %23, %8 : vector<64x64xi1>
    %cst_11 = arith.constant 1.000000e+00 : f32
    %cst_12 = arith.constant 0.000000e+00 : f32
    %25 = vector.broadcast %cst_11 : f32 to vector<64x64xf32>
    %26 = vector.broadcast %cst_12 : f32 to vector<64x64xf32>
    %27 = arith.select %24, %25, %26 : vector<64x64xi1>, vector<64x64xf32>
    %cst_13 = arith.constant dense<0.000000e+00> : vector<64xf32>
    %28 = vector.multi_reduction <add>, %27, %cst_13 [1] : vector<64x64xf32> to vector<64xf32>
    %29 = vector.shape_cast %28 : vector<64xf32> to vector<64x1xf32>
    %30 = math.rsqrt %29 : vector<64x1xf32>
    %cst_14 = arith.constant dense<0.000000e+00> : vector<64x128xf32>
    %31 = tpu.matmul %0, %2, %cst_14 {dimension_numbers = #tpu.dot_dimension_numbers<[1], [0], [0], [1], [0, 0, 1, 1], [], []>} : vector<64x128xf32>, vector<128x128xf32>, vector<64x128xf32> -> vector<64x128xf32>
    %32 = vector.broadcast %30 : vector<64x1xf32> to vector<64x128xf32>
    %33 = arith.mulf %32, %31 : vector<64x128xf32>
    %cst_15 = arith.constant dense<0.000000e+00> : vector<64x128xf32>
    %34 = tpu.matmul %27, %33, %cst_15 {dimension_numbers = #tpu.dot_dimension_numbers<[1], [0], [0], [1], [0, 0, 1, 1], [], []>} : vector<64x64xf32>, vector<64x128xf32>, vector<64x128xf32> -> vector<64x128xf32>
    %35 = vector.broadcast %30 : vector<64x1xf32> to vector<64x128xf32>
    %36 = arith.mulf %35, %34 : vector<64x128xf32>
    %37 = vector.broadcast %3 : vector<1x128xf32> to vector<64x128xf32>
    %38 = arith.addf %36, %37 : vector<64x128xf32>
    %c0_16 = arith.constant 0 : index
    %c0_17 = arith.constant 0 : index
    %39 = vector.load %arg4[%c0_16, %c0_17] : memref<64x128xf32, #tpu.memory_space<vmem>>, vector<64x128xf32>
    tpu.vector_store %arg4[%c0_16, %c0_17], %38 {strides = array<i32>} : memref<64x128xf32, #tpu.memory_space<vmem>>, vector<64x128xf32>,
    return
  }
}

</mosaic_0001>

<llo_original>
// kernel: adaptive_gcn_layer.1
$region0: #{adaptive_gcn_layer.1}
  #allocation0 [shape = 'u32[]', space=smem, size = 0x4, offset = 0x4, fixed_abs, tag = 'smem constant byte address 0x4 - core index']
  #allocation1 [shape = 'u32[72,128]{1,0:T(1,128)}', space=vmem, size = 0x9000, scoped, tag = 'internal scratch']
  %s0 = inlined_call_operand.vmem [shape: f32[64,128], index: 0, kind: input, shape index: {}]
  %s1 = inlined_call_operand.vmem [shape: f32[128,128], index: 1, kind: input, shape index: {}]
  %s2 = inlined_call_operand.vmem [shape: f32[128,128], index: 2, kind: input, shape index: {}]
  %s3 = inlined_call_operand.vmem [shape: f32[1,128], index: 3, kind: input, shape index: {}]
  %s4 = inlined_call_operand.vmem [shape: f32[64,128], index: 4, kind: output, shape index: {}]
  %s5 = sld [smem:[#allocation0]]
  $region26: #{adaptive_gcn_layer.1} parent=0
    _
  %s7 = ssub.s32 1, %s5
  %s8 = scalar_select 0, %s7, %s5
  // Predicated region
  $region2: #{adaptive_gcn_layer.1} parent=0 // pred_check
    _
  $region3: #{adaptive_gcn_layer.1} parent=0 // pred_check_branch
    %10 = sbr.rel (0) target = $region5
  $region4: #{adaptive_gcn_layer.1} parent=0 // pred_region
    _
  $region5: #{adaptive_gcn_layer.1} parent=0 // pred_fallthru
    _
  // Predicated region
  $region6: #{adaptive_gcn_layer.1} parent=0 // pred_check
    _
  $region7: #{adaptive_gcn_layer.1} parent=0 // pred_check_branch
    %12 = sbr.rel (0) target = $region9
  $region8: #{adaptive_gcn_layer.1} parent=0 // pred_region
    _
  $region9: #{adaptive_gcn_layer.1} parent=0 // pred_fallthru
    _
  // Predicated region
  $region10: #{adaptive_gcn_layer.1} parent=0 // pred_check
    _
  $region11: #{adaptive_gcn_layer.1} parent=0 // pred_check_branch
    %14 = sbr.rel (0) target = $region13
  $region12: #{adaptive_gcn_layer.1} parent=0 // pred_region
    _
  $region13: #{adaptive_gcn_layer.1} parent=0 // pred_fallthru
    _
  // Predicated region
  $region14: #{adaptive_gcn_layer.1} parent=0 // pred_check
    _
  $region15: #{adaptive_gcn_layer.1} parent=0 // pred_check_branch
    %16 = sbr.rel (0) target = $region17
  $region16: #{adaptive_gcn_layer.1} parent=0 // pred_region
    _
  $region17: #{adaptive_gcn_layer.1} parent=0 // pred_fallthru
    _
  %v17 = vld [vmem:[%s0] sm:$0xff]
  %v18 = vld [vmem:[%s0 + $0x8] sm:$0xff]
  %v19 = vld [vmem:[%s0 + $0x10] sm:$0xff]
  %v20 = vld [vmem:[%s0 + $0x18] sm:$0xff]
  %v21 = vld [vmem:[%s0 + $0x20] sm:$0xff]
  %v22 = vld [vmem:[%s0 + $0x28] sm:$0xff]
  %v23 = vld [vmem:[%s0 + $0x30] sm:$0xff]
  %v24 = vld [vmem:[%s0 + $0x38] sm:$0xff]
  %v25 = vld [vmem:[%s1] sm:$0xff]
  %v26 = vld [vmem:[%s1 + $0x8] sm:$0xff]
  %v27 = vld [vmem:[%s1 + $0x10] sm:$0xff]
  %v28 = vld [vmem:[%s1 + $0x18] sm:$0xff]
  %v29 = vld [vmem:[%s1 + $0x20] sm:$0xff]
  %v30 = vld [vmem:[%s1 + $0x28] sm:$0xff]
  %v31 = vld [vmem:[%s1 + $0x30] sm:$0xff]
  %v32 = vld [vmem:[%s1 + $0x38] sm:$0xff]
  %v33 = vld [vmem:[%s1 + $0x40] sm:$0xff]
  %v34 = vld [vmem:[%s1 + $0x48] sm:$0xff]
  %v35 = vld [vmem:[%s1 + $0x50] sm:$0xff]
  %v36 = vld [vmem:[%s1 + $0x58] sm:$0xff]
  %v37 = vld [vmem:[%s1 + $0x60] sm:$0xff]
  %v38 = vld [vmem:[%s1 + $0x68] sm:$0xff]
  %v39 = vld [vmem:[%s1 + $0x70] sm:$0xff]
  %v40 = vld [vmem:[%s1 + $0x78] sm:$0xff]
  %v41 = vld [vmem:[%s2] sm:$0xff]
  %v42 = vld [vmem:[%s2 + $0x8] sm:$0xff]
  %v43 = vld [vmem:[%s2 + $0x10] sm:$0xff]
  %v44 = vld [vmem:[%s2 + $0x18] sm:$0xff]
  %v45 = vld [vmem:[%s2 + $0x20] sm:$0xff]
  %v46 = vld [vmem:[%s2 + $0x28] sm:$0xff]
  %v47 = vld [vmem:[%s2 + $0x30] sm:$0xff]
  %v48 = vld [vmem:[%s2 + $0x38] sm:$0xff]
  %v49 = vld [vmem:[%s2 + $0x40] sm:$0xff]
  %v50 = vld [vmem:[%s2 + $0x48] sm:$0xff]
  %v51 = vld [vmem:[%s2 + $0x50] sm:$0xff]
  %v52 = vld [vmem:[%s2 + $0x58] sm:$0xff]
  %v53 = vld [vmem:[%s2 + $0x60] sm:$0xff]
  %v54 = vld [vmem:[%s2 + $0x68] sm:$0xff]
  %v55 = vld [vmem:[%s2 + $0x70] sm:$0xff]
  %v56 = vld [vmem:[%s2 + $0x78] sm:$0xff]
  %v57 = vld [vmem:[%s3] sm:$0x1]
  %v58 = vlaneseq
  %v59 = vshrl.u32 %v58, 7
  %v60 = vadd.s32 %v59, 8
  %v61 = vadd.s32 %v59, 16
  %v62 = vadd.s32 %v59, 24
  %v63 = vadd.s32 %v59, 32
  %v64 = vadd.s32 %v59, 40
  %v65 = vadd.s32 %v59, 48
  %v66 = vadd.s32 %v59, 56
  %v67 = vlaneseq
  %v68 = vand.u32 %v67, 127
  %vm69 = vcmp.eq.s32.totalorder %v59, %v68
  %vm70 = vcmp.eq.s32.totalorder %v60, %v68
  %vm71 = vcmp.eq.s32.totalorder %v61, %v68
  %vm72 = vcmp.eq.s32.totalorder %v62, %v68
  %vm73 = vcmp.eq.s32.totalorder %v63, %v68
  %vm74 = vcmp.eq.s32.totalorder %v64, %v68
  %vm75 = vcmp.eq.s32.totalorder %v65, %v68
  %vm76 = vcmp.eq.s32.totalorder %v66, %v68
  %77 = vmatpush.msra.mxu0 %v40
  %78 = vmatpush.msra.mxu0 %v39
  %79 = vmatpush.msra.mxu0 %v38
  %80 = vmatpush.msra.mxu0 %v37
  %81 = vmatpush.msra.mxu0 %v36
  %82 = vmatpush.msra.mxu0 %v35
  %83 = vmatpush.msra.mxu0 %v34
  %84 = vmatpush.msra.mxu0 %v33
  %85 = vmatpush.msra.mxu0 %v32
  %86 = vmatpush.msra.mxu0 %v31
  %87 = vmatpush.msra.mxu0 %v30
  %88 = vmatpush.msra.mxu0 %v29
  %89 = vmatpush.msra.mxu0 %v28
  %90 = vmatpush.msra.mxu0 %v27
  %91 = vmatpush.msra.mxu0 %v26
  %92 = vmatpush.msra.mxu0 %v25
  %93 = vmatmul.f32.gmra.mxu0 %v17
  %v94 = vpop.f32.mrf.mxu0
  %v95 = vadd.f32 0.0, %v94
  %96 = vmatmul.f32.gmra.mxu0 %v18
  %v97 = vpop.f32.mrf.mxu0
  %v98 = vadd.f32 0.0, %v97
  %99 = vmatmul.f32.gmra.mxu0 %v19
  %v100 = vpop.f32.mrf.mxu0
  %v101 = vadd.f32 0.0, %v100
  %102 = vmatmul.f32.gmra.mxu0 %v20
  %v103 = vpop.f32.mrf.mxu0
  %v104 = vadd.f32 0.0, %v103
  %105 = vmatmul.f32.gmra.mxu0 %v21
  %v106 = vpop.f32.mrf.mxu0
  %v107 = vadd.f32 0.0, %v106
  %108 = vmatmul.f32.gmra.mxu0 %v22
  %v109 = vpop.f32.mrf.mxu0
  %v110 = vadd.f32 0.0, %v109
  %111 = vmatmul.f32.gmra.mxu0 %v23
  %v112 = vpop.f32.mrf.mxu0
  %v113 = vadd.f32 0.0, %v112
  %114 = vmatmul.f32.gmra.mxu0 %v24
  %v115 = vpop.f32.mrf.mxu0
  %v116 = vadd.f32 0.0, %v115
  %117 = vdwg.mxu0
  %118 = vmatpush.xpose.msra.mxu0 0.0
  %119 = vmatpush.xpose.msra.mxu0 0.0
  %120 = vmatpush.xpose.msra.mxu0 0.0
  %121 = vmatpush.xpose.msra.mxu0 0.0
  %122 = vmatpush.xpose.msra.mxu0 0.0
  %123 = vmatpush.xpose.msra.mxu0 0.0
  %124 = vmatpush.xpose.msra.mxu0 0.0
  %125 = vmatpush.xpose.msra.mxu0 0.0
  %126 = vmatpush.xpose.msra.mxu0 %v24
  %127 = vmatpush.xpose.msra.mxu0 %v23
  %128 = vmatpush.xpose.msra.mxu0 %v22
  %129 = vmatpush.xpose.msra.mxu0 %v21
  %130 = vmatpush.xpose.msra.mxu0 %v20
  %131 = vmatpush.xpose.msra.mxu0 %v19
  %132 = vmatpush.xpose.msra.mxu0 %v18
  %133 = vmatpush.xpose.msra.mxu0 %v17
  %134 = vmatmul.f32.gmra.mxu0 %v95
  %v135 = vpop.f32.mrf.mxu0
  %v136 = vadd.f32 0.0, %v135
  %137 = vmatmul.f32.gmra.mxu0 %v98
  %v138 = vpop.f32.mrf.mxu0
  %v139 = vadd.f32 0.0, %v138
  %140 = vmatmul.f32.gmra.mxu0 %v101
  %v141 = vpop.f32.mrf.mxu0
  %v142 = vadd.f32 0.0, %v141
  %143 = vmatmul.f32.gmra.mxu0 %v104
  %v144 = vpop.f32.mrf.mxu0
  %v145 = vadd.f32 0.0, %v144
  %146 = vmatmul.f32.gmra.mxu0 %v107
  %v147 = vpop.f32.mrf.mxu0
  %v148 = vadd.f32 0.0, %v147
  %149 = vmatmul.f32.gmra.mxu0 %v110
  %v150 = vpop.f32.mrf.mxu0
  %v151 = vadd.f32 0.0, %v150
  %152 = vmatmul.f32.gmra.mxu0 %v113
  %v153 = vpop.f32.mrf.mxu0
  %v154 = vadd.f32 0.0, %v153
  %155 = vmatmul.f32.gmra.mxu0 %v116
  %v156 = vpop.f32.mrf.mxu0
  %v157 = vadd.f32 0.0, %v156
  %158 = vdwg.mxu0
  %v159 = vadd.f32 %v136, 1.0
  %v160 = vadd.f32 %v139, 1.0
  %v161 = vadd.f32 %v142, 1.0
  %v162 = vadd.f32 %v145, 1.0
  %v163 = vadd.f32 %v148, 1.0
  %v164 = vadd.f32 %v151, 1.0
  %v165 = vadd.f32 %v154, 1.0
  %v166 = vadd.f32 %v157, 1.0
  %v167 = vsel %vm69, %v159, %v136
  %v168 = vsel %vm70, %v160, %v139
  %v169 = vsel %vm71, %v161, %v142
  %v170 = vsel %vm72, %v162, %v145
  %v171 = vsel %vm73, %v163, %v148
  %v172 = vsel %vm74, %v164, %v151
  %v173 = vsel %vm75, %v165, %v154
  %v174 = vsel %vm76, %v166, %v157
  %vm175 = vcmask 523264
  %v176 = vsel %vm175, %v167, 0.0
  %177 = vadd.xlane.f32.xlu0 %v176
  %v178 = vpop.xlane.xlu0 %177
  %v179 = vsel %vm175, %v168, 0.0
  %180 = vadd.xlane.f32.xlu0 %v179
  %v181 = vpop.xlane.xlu0 %180
  %v182 = vsel %vm175, %v169, 0.0
  %183 = vadd.xlane.f32.xlu0 %v182
  %v184 = vpop.xlane.xlu0 %183
  %v185 = vsel %vm175, %v170, 0.0
  %186 = vadd.xlane.f32.xlu0 %v185
  %v187 = vpop.xlane.xlu0 %186
  %v188 = vsel %vm175, %v171, 0.0
  %189 = vadd.xlane.f32.xlu0 %v188
  %v190 = vpop.xlane.xlu0 %189
  %v191 = vsel %vm175, %v172, 0.0
  %192 = vadd.xlane.f32.xlu0 %v191
  %v193 = vpop.xlane.xlu0 %192
  %v194 = vsel %vm175, %v173, 0.0
  %195 = vadd.xlane.f32.xlu0 %v194
  %v196 = vpop.xlane.xlu0 %195
  %v197 = vsel %vm175, %v174, 0.0
  %198 = vadd.xlane.f32.xlu0 %v197
  %v199 = vpop.xlane.xlu0 %198
  %v200 = vrsqrt.pop %v178
  %v201 = vmul.f32 %v200, %v178
  %v202 = vmul.f32 %v201, %v200
  %v203 = vmul.f32 0.5, %v202
  %v204 = vsub.f32 1.5, %v203
  %v205 = vmul.f32 %v200, %v204
  %vm206 = vweird.f32 %v178
  %vm207 = vweird.f32 %v200
  %vm208 = vmor %vm206, %vm207
  %v209 = vsel %vm208, %v200, %v205
  %v210 = vrsqrt.pop %v181
  %v211 = vmul.f32 %v210, %v181
  %v212 = vmul.f32 %v211, %v210
  %v213 = vmul.f32 0.5, %v212
  %v214 = vsub.f32 1.5, %v213
  %v215 = vmul.f32 %v210, %v214
  %vm216 = vweird.f32 %v181
  %vm217 = vweird.f32 %v210
  %vm218 = vmor %vm216, %vm217
  %v219 = vsel %vm218, %v210, %v215
  %v220 = vrsqrt.pop %v184
  %v221 = vmul.f32 %v220, %v184
  %v222 = vmul.f32 %v221, %v220
  %v223 = vmul.f32 0.5, %v222
  %v224 = vsub.f32 1.5, %v223
  %v225 = vmul.f32 %v220, %v224
  %vm226 = vweird.f32 %v184
  %vm227 = vweird.f32 %v220
  %vm228 = vmor %vm226, %vm227
  %v229 = vsel %vm228, %v220, %v225
  %v230 = vrsqrt.pop %v187
  %v231 = vmul.f32 %v230, %v187
  %v232 = vmul.f32 %v231, %v230
  %v233 = vmul.f32 0.5, %v232
  %v234 = vsub.f32 1.5, %v233
  %v235 = vmul.f32 %v230, %v234
  %vm236 = vweird.f32 %v187
  %vm237 = vweird.f32 %v230
  %vm238 = vmor %vm236, %vm237
  %v239 = vsel %vm238, %v230, %v235
  %v240 = vrsqrt.pop %v190
  %v241 = vmul.f32 %v240, %v190
  %v242 = vmul.f32 %v241, %v240
  %v243 = vmul.f32 0.5, %v242
  %v244 = vsub.f32 1.5, %v243
  %v245 = vmul.f32 %v240, %v244
  %vm246 = vweird.f32 %v190
  %vm247 = vweird.f32 %v240
  %vm248 = vmor %vm246, %vm247
  %v249 = vsel %vm248, %v240, %v245
  %v250 = vrsqrt.pop %v193
  %v251 = vmul.f32 %v250, %v193
  %v252 = vmul.f32 %v251, %v250
  %v253 = vmul.f32 0.5, %v252
  %v254 = vsub.f32 1.5, %v253
  %v255 = vmul.f32 %v250, %v254
  %vm256 = vweird.f32 %v193
  %vm257 = vweird.f32 %v250
  %vm258 = vmor %vm256, %vm257
  %v259 = vsel %vm258, %v250, %v255
  %v260 = vrsqrt.pop %v196
  %v261 = vmul.f32 %v260, %v196
  %v262 = vmul.f32 %v261, %v260
  %v263 = vmul.f32 0.5, %v262
  %v264 = vsub.f32 1.5, %v263
  %v265 = vmul.f32 %v260, %v264
  %vm266 = vweird.f32 %v196
  %vm267 = vweird.f32 %v260
  %vm268 = vmor %vm266, %vm267
  %v269 = vsel %vm268, %v260, %v265
  %v270 = vrsqrt.pop %v199
  %v271 = vmul.f32 %v270, %v199
  %v272 = vmul.f32 %v271, %v270
  %v273 = vmul.f32 0.5, %v272
  %v274 = vsub.f32 1.5, %v273
  %v275 = vmul.f32 %v270, %v274
  %vm276 = vweird.f32 %v199
  %vm277 = vweird.f32 %v270
  %vm278 = vmor %vm276, %vm277
  %v279 = vsel %vm278, %v270, %v275
  %v280 = vmul.f32 %v167, %v209
  %v281 = vmul.f32 %v168, %v219
  %v282 = vmul.f32 %v169, %v229
  %v283 = vmul.f32 %v170, %v239
  %v284 = vmul.f32 %v171, %v249
  %v285 = vmul.f32 %v172, %v259
  %v286 = vmul.f32 %v173, %v269
  %v287 = vmul.f32 %v174, %v279
  %288 = vxpose.xlu0.b32.start [1/16] %v209, 128
  %289 = vxpose.xlu0.b32.cont [2/16] %v219, 128
  %290 = vxpose.xlu0.b32.cont [3/16] %v229, 128
  %291 = vxpose.xlu0.b32.cont [4/16] %v239, 128
  %292 = vxpose.xlu0.b32.cont [5/16] %v249, 128
  %293 = vxpose.xlu0.b32.cont [6/16] %v259, 128
  %294 = vxpose.xlu0.b32.cont [7/16] %v269, 128
  %295 = vxpose.xlu0.b32.cont [8/16] %v279, 128
  %296 = vxpose.xlu0.b32.cont [9/16] 0.0, 128
  %297 = vxpose.xlu0.b32.cont [10/16] 0.0, 128
  %298 = vxpose.xlu0.b32.cont [11/16] 0.0, 128
  %299 = vxpose.xlu0.b32.cont [12/16] 0.0, 128
  %300 = vxpose.xlu0.b32.cont [13/16] 0.0, 128
  %301 = vxpose.xlu0.b32.cont [14/16] 0.0, 128
  %302 = vxpose.xlu0.b32.cont [15/16] 0.0, 128
  %303 = vxpose.xlu0.b32.end [16/16] 0.0, 128
  %v304 = vpop.trf.xlu0
  %v305 = vpop.trf.xlu0
  %v306 = vpop.trf.xlu0
  %v307 = vpop.trf.xlu0
  %v308 = vpop.trf.xlu0
  %v309 = vpop.trf.xlu0
  %v310 = vpop.trf.xlu0
  %v311 = vpop.trf.xlu0
  %v312 = vpop.trf.xlu0
  %v313 = vpop.trf.xlu0
  %v314 = vpop.trf.xlu0
  %v315 = vpop.trf.xlu0
  %v316 = vpop.trf.xlu0
  %v317 = vpop.trf.xlu0
  %v318 = vpop.trf.xlu0
  %v319 = vpop.trf.xlu0
  %v320 = vperm.slane %v304, 0
  %v321 = vmul.f32 %v280, %v320
  %v322 = vmul.f32 %v281, %v320
  %v323 = vmul.f32 %v282, %v320
  %v324 = vmul.f32 %v283, %v320
  %v325 = vmul.f32 %v284, %v320
  %v326 = vmul.f32 %v285, %v320
  %v327 = vmul.f32 %v286, %v320
  %v328 = vmul.f32 %v287, %v320
  %vm329 = vcmp.ne.f32.partialorder %v321, 0.0
  %vm330 = vcmp.ne.f32.partialorder %v322, 0.0
  %vm331 = vcmp.ne.f32.partialorder %v323, 0.0
  %vm332 = vcmp.ne.f32.partialorder %v324, 0.0
  %vm333 = vcmp.ne.f32.partialorder %v325, 0.0
  %vm334 = vcmp.ne.f32.partialorder %v326, 0.0
  %vm335 = vcmp.ne.f32.partialorder %v327, 0.0
  %vm336 = vcmp.ne.f32.partialorder %v328, 0.0
  %vm337 = vmor %vm329, %vm69
  %vm338 = vmor %vm330, %vm70
  %vm339 = vmor %vm331, %vm71
  %vm340 = vmor %vm332, %vm72
  %vm341 = vmor %vm333, %vm73
  %vm342 = vmor %vm334, %vm74
  %vm343 = vmor %vm335, %vm75
  %vm344 = vmor %vm336, %vm76
  %v345 = vsel %vm337, 1.0, 0.0
  %v346 = vsel %vm338, 1.0, 0.0
  %v347 = vsel %vm339, 1.0, 0.0
  %v348 = vsel %vm340, 1.0, 0.0
  %v349 = vsel %vm341, 1.0, 0.0
  %v350 = vsel %vm342, 1.0, 0.0
  %v351 = vsel %vm343, 1.0, 0.0
  %v352 = vsel %vm344, 1.0, 0.0
  %v353 = vsel %vm175, %v345, 0.0
  %354 = vadd.xlane.f32.xlu0 %v353
  %v355 = vpop.xlane.xlu0 %354
  %v356 = vsel %vm175, %v346, 0.0
  %357 = vadd.xlane.f32.xlu0 %v356
  %v358 = vpop.xlane.xlu0 %357
  %v359 = vsel %vm175, %v347, 0.0
  %360 = vadd.xlane.f32.xlu0 %v359
  %v361 = vpop.xlane.xlu0 %360
  %v362 = vsel %vm175, %v348, 0.0
  %363 = vadd.xlane.f32.xlu0 %v362
  %v364 = vpop.xlane.xlu0 %363
  %v365 = vsel %vm175, %v349, 0.0
  %366 = vadd.xlane.f32.xlu0 %v365
  %v367 = vpop.xlane.xlu0 %366
  %v368 = vsel %vm175, %v350, 0.0
  %369 = vadd.xlane.f32.xlu0 %v368
  %v370 = vpop.xlane.xlu0 %369
  %v371 = vsel %vm175, %v351, 0.0
  %372 = vadd.xlane.f32.xlu0 %v371
  %v373 = vpop.xlane.xlu0 %372
  %v374 = vsel %vm175, %v352, 0.0
  %375 = vadd.xlane.f32.xlu0 %v374
  %v376 = vpop.xlane.xlu0 %375
  %v377 = vrsqrt.pop %v355
  %v378 = vmul.f32 %v377, %v355
  %v379 = vmul.f32 %v378, %v377
  %v380 = vmul.f32 0.5, %v379
  %v381 = vsub.f32 1.5, %v380
  %v382 = vmul.f32 %v377, %v381
  %vm383 = vweird.f32 %v355
  %vm384 = vweird.f32 %v377
  %vm385 = vmor %vm383, %vm384
  %v386 = vsel %vm385, %v377, %v382
  %v387 = vrsqrt.pop %v358
  %v388 = vmul.f32 %v387, %v358
  %v389 = vmul.f32 %v388, %v387
  %v390 = vmul.f32 0.5, %v389
  %v391 = vsub.f32 1.5, %v390
  %v392 = vmul.f32 %v387, %v391
  %vm393 = vweird.f32 %v358
  %vm394 = vweird.f32 %v387
  %vm395 = vmor %vm393, %vm394
  %v396 = vsel %vm395, %v387, %v392
  %v397 = vrsqrt.pop %v361
  %v398 = vmul.f32 %v397, %v361
  %v399 = vmul.f32 %v398, %v397
  %v400 = vmul.f32 0.5, %v399
  %v401 = vsub.f32 1.5, %v400
  %v402 = vmul.f32 %v397, %v401
  %vm403 = vweird.f32 %v361
  %vm404 = vweird.f32 %v397
  %vm405 = vmor %vm403, %vm404
  %v406 = vsel %vm405, %v397, %v402
  %v407 = vrsqrt.pop %v364
  %v408 = vmul.f32 %v407, %v364
  %v409 = vmul.f32 %v408, %v407
  %v410 = vmul.f32 0.5, %v409
  %v411 = vsub.f32 1.5, %v410
  %v412 = vmul.f32 %v407, %v411
  %vm413 = vweird.f32 %v364
  %vm414 = vweird.f32 %v407
  %vm415 = vmor %vm413, %vm414
  %v416 = vsel %vm415, %v407, %v412
  %v417 = vrsqrt.pop %v367
  %v418 = vmul.f32 %v417, %v367
  %v419 = vmul.f32 %v418, %v417
  %v420 = vmul.f32 0.5, %v419
  %v421 = vsub.f32 1.5, %v420
  %v422 = vmul.f32 %v417, %v421
  %vm423 = vweird.f32 %v367
  %vm424 = vweird.f32 %v417
  %vm425 = vmor %vm423, %vm424
  %v426 = vsel %vm425, %v417, %v422
  %v427 = vrsqrt.pop %v370
  %v428 = vmul.f32 %v427, %v370
  %v429 = vmul.f32 %v428, %v427
  %v430 = vmul.f32 0.5, %v429
  %v431 = vsub.f32 1.5, %v430
  %v432 = vmul.f32 %v427, %v431
  %vm433 = vweird.f32 %v370
  %vm434 = vweird.f32 %v427
  %vm435 = vmor %vm433, %vm434
  %v436 = vsel %vm435, %v427, %v432
  %v437 = vrsqrt.pop %v373
  %v438 = vmul.f32 %v437, %v373
  %v439 = vmul.f32 %v438, %v437
  %v440 = vmul.f32 0.5, %v439
  %v441 = vsub.f32 1.5, %v440
  %v442 = vmul.f32 %v437, %v441
  %vm443 = vweird.f32 %v373
  %vm444 = vweird.f32 %v437
  %vm445 = vmor %vm443, %vm444
  %v446 = vsel %vm445, %v437, %v442
  %v447 = vrsqrt.pop %v376
  %v448 = vmul.f32 %v447, %v376
  %v449 = vmul.f32 %v448, %v447
  %v450 = vmul.f32 0.5, %v449
  %v451 = vsub.f32 1.5, %v450
  %v452 = vmul.f32 %v447, %v451
  %vm453 = vweird.f32 %v376
  %vm454 = vweird.f32 %v447
  %vm455 = vmor %vm453, %vm454
  %v456 = vsel %vm455, %v447, %v452
  %457 = vmatpush.msra.mxu0 %v56
  %458 = vmatpush.msra.mxu0 %v55
  %459 = vmatpush.msra.mxu0 %v54
  %460 = vmatpush.msra.mxu0 %v53
  %461 = vmatpush.msra.mxu0 %v52
  %462 = vmatpush.msra.mxu0 %v51
  %463 = vmatpush.msra.mxu0 %v50
  %464 = vmatpush.msra.mxu0 %v49
  %465 = vmatpush.msra.mxu0 %v48
  %466 = vmatpush.msra.mxu0 %v47
  %467 = vmatpush.msra.mxu0 %v46
  %468 = vmatpush.msra.mxu0 %v45
  %469 = vmatpush.msra.mxu0 %v44
  %470 = vmatpush.msra.mxu0 %v43
  %471 = vmatpush.msra.mxu0 %v42
  %472 = vmatpush.msra.mxu0 %v41
  %473 = vmatmul.f32.gmra.mxu0 %v17
  %v474 = vpop.f32.mrf.mxu0
  %v475 = vadd.f32 0.0, %v474
  %476 = vmatmul.f32.gmra.mxu0 %v18
  %v477 = vpop.f32.mrf.mxu0
  %v478 = vadd.f32 0.0, %v477
  %479 = vmatmul.f32.gmra.mxu0 %v19
  %v480 = vpop.f32.mrf.mxu0
  %v481 = vadd.f32 0.0, %v480
  %482 = vmatmul.f32.gmra.mxu0 %v20
  %v483 = vpop.f32.mrf.mxu0
  %v484 = vadd.f32 0.0, %v483
  %485 = vmatmul.f32.gmra.mxu0 %v21
  %v486 = vpop.f32.mrf.mxu0
  %v487 = vadd.f32 0.0, %v486
  %488 = vmatmul.f32.gmra.mxu0 %v22
  %v489 = vpop.f32.mrf.mxu0
  %v490 = vadd.f32 0.0, %v489
  %491 = vmatmul.f32.gmra.mxu0 %v23
  %v492 = vpop.f32.mrf.mxu0
  %v493 = vadd.f32 0.0, %v492
  %494 = vmatmul.f32.gmra.mxu0 %v24
  %v495 = vpop.f32.mrf.mxu0
  %v496 = vadd.f32 0.0, %v495
  %497 = vdwg.mxu0
  %v498 = vmul.f32 %v386, %v475
  %v499 = vmul.f32 %v396, %v478
  %v500 = vmul.f32 %v406, %v481
  %v501 = vmul.f32 %v416, %v484
  %v502 = vmul.f32 %v426, %v487
  %v503 = vmul.f32 %v436, %v490
  %v504 = vmul.f32 %v446, %v493
  %v505 = vmul.f32 %v456, %v496
  %v507 = vsel %vm175, %v345, 0
  %v510 = vsel %vm175, %v346, 0
  %v513 = vsel %vm175, %v347, 0
  %v516 = vsel %vm175, %v348, 0
  %v519 = vsel %vm175, %v349, 0
  %v522 = vsel %vm175, %v350, 0
  %v525 = vsel %vm175, %v351, 0
  %v528 = vsel %vm175, %v352, 0
  %530 = vmatpush.msra.mxu0 0.0
  %531 = vmatpush.msra.mxu0 0.0
  %532 = vmatpush.msra.mxu0 0.0
  %533 = vmatpush.msra.mxu0 0.0
  %534 = vmatpush.msra.mxu0 0.0
  %535 = vmatpush.msra.mxu0 0.0
  %536 = vmatpush.msra.mxu0 0.0
  %537 = vmatpush.msra.mxu0 0.0
  %538 = vmatpush.msra.mxu0 %v505
  %539 = vmatpush.msra.mxu0 %v504
  %540 = vmatpush.msra.mxu0 %v503
  %541 = vmatpush.msra.mxu0 %v502
  %542 = vmatpush.msra.mxu0 %v501
  %543 = vmatpush.msra.mxu0 %v500
  %544 = vmatpush.msra.mxu0 %v499
  %545 = vmatpush.msra.mxu0 %v498
  %546 = vmatmul.f32.gmra.mxu0 %v507
  %v547 = vpop.f32.mrf.mxu0
  %v548 = vadd.f32 0.0, %v547
  %549 = vmatmul.f32.gmra.mxu0 %v510
  %v550 = vpop.f32.mrf.mxu0
  %v551 = vadd.f32 0.0, %v550
  %552 = vmatmul.f32.gmra.mxu0 %v513
  %v553 = vpop.f32.mrf.mxu0
  %v554 = vadd.f32 0.0, %v553
  %555 = vmatmul.f32.gmra.mxu0 %v516
  %v556 = vpop.f32.mrf.mxu0
  %v557 = vadd.f32 0.0, %v556
  %558 = vmatmul.f32.gmra.mxu0 %v519
  %v559 = vpop.f32.mrf.mxu0
  %v560 = vadd.f32 0.0, %v559
  %561 = vmatmul.f32.gmra.mxu0 %v522
  %v562 = vpop.f32.mrf.mxu0
  %v563 = vadd.f32 0.0, %v562
  %564 = vmatmul.f32.gmra.mxu0 %v525
  %v565 = vpop.f32.mrf.mxu0
  %v566 = vadd.f32 0.0, %v565
  %567 = vmatmul.f32.gmra.mxu0 %v528
  %v568 = vpop.f32.mrf.mxu0
  %v569 = vadd.f32 0.0, %v568
  %570 = vdwg.mxu0
  %v571 = vmul.f32 %v386, %v548
  %v572 = vmul.f32 %v396, %v551
  %v573 = vmul.f32 %v406, %v554
  %v574 = vmul.f32 %v416, %v557
  %v575 = vmul.f32 %v426, %v560
  %v576 = vmul.f32 %v436, %v563
  %v577 = vmul.f32 %v446, %v566
  %v578 = vmul.f32 %v456, %v569
  %v580 = vperm.slane %v57, 0
  %v582 = vadd.f32 %v571, %v580
  %v583 = vadd.f32 %v572, %v580
  %v584 = vadd.f32 %v573, %v580
  %v585 = vadd.f32 %v574, %v580
  %v586 = vadd.f32 %v575, %v580
  %v587 = vadd.f32 %v576, %v580
  %v588 = vadd.f32 %v577, %v580
  %v589 = vadd.f32 %v578, %v580
  %590 = vst [vmem:[%s4] sm:$0xff] %v582
  %591 = vst [vmem:[%s4 + $0x8] sm:$0xff] %v583
  %592 = vst [vmem:[%s4 + $0x10] sm:$0xff] %v584
  %593 = vst [vmem:[%s4 + $0x18] sm:$0xff] %v585
  %594 = vst [vmem:[%s4 + $0x20] sm:$0xff] %v586
  %595 = vst [vmem:[%s4 + $0x28] sm:$0xff] %v587
  %596 = vst [vmem:[%s4 + $0x30] sm:$0xff] %v588
  %597 = vst [vmem:[%s4 + $0x38] sm:$0xff] %v589
  // Predicated region
  $region18: #{adaptive_gcn_layer.1} parent=0 // pred_check
    _
  $region19: #{adaptive_gcn_layer.1} parent=0 // pred_check_branch
    %599 = sbr.rel (0) target = $region21
  $region20: #{adaptive_gcn_layer.1} parent=0 // pred_region
    _
  $region21: #{adaptive_gcn_layer.1} parent=0 // pred_fallthru
    _
  // Predicated region
  $region22: #{adaptive_gcn_layer.1} parent=0 // pred_check
    _
  $region23: #{adaptive_gcn_layer.1} parent=0 // pred_check_branch
    %601 = sbr.rel (0) target = $region25
  $region24: #{adaptive_gcn_layer.1} parent=0 // pred_region
    _
  $region25: #{adaptive_gcn_layer.1} parent=0 // pred_fallthru
    _

</llo_original>
